<compile_context>
chip_gen: v7x
topology: tpu7x:2x2x1
jax: 0.10.0
libtpu: 0.0.40
codegen_flags: <defaults>
</compile_context>

<pallas_src>
import jax
import jax.numpy as jnp
from jax import lax
from jax.experimental import pallas as pl
from jax.experimental.pallas import tpu as pltpu


# -----------------------------------------------------------------------------
# Kernel factory: one grid step == one chunk of T_BLK RNN time steps.
# -----------------------------------------------------------------------------
def _make_rnn_chunk_kernel(t_blk, seq_len):
    """Build the chunked-recurrence kernel (t_blk / seq_len are static)."""

    def kernel(x_ref,      # (T_BLK, B_pad, I_pad)       inputs for this chunk
               h0_ref,     # (B_pad, H_pad)              initial hidden (resident)
               w_ref,      # (I_pad + H_pad, H_pad)      fused [wi; wh], bias folded
               wo_ref,     # (H_pad, O_pad)              h2o weight (resident)
               bo_ref,     # (1, O_pad)                  h2o bias   (resident)
               out_ref,    # (T_BLK, B_pad, O_pad)       outputs for this chunk
               h_out_ref,  # (B_pad, H_pad)              final hidden (constant idx)
               h_carry,    # VMEM (B_pad, H_pad)         hidden carried across chunks
               h_hist):    # VMEM (T_BLK, B_pad, H_pad)  per-step hidden history
        chunk = pl.program_id(0)

        # Seed the carried hidden state from h0 on the first chunk only.
        @pl.when(chunk == 0)
        def _():
            h_carry[...] = h0_ref[...]

        # Hoist resident weight load out of the unrolled step loop.
        w = w_ref[...]

        def body(step, h):
            x_t = x_ref[step]                            # (B_pad, I_pad)
            # [x_t | h] is lane-aligned (both halves are multiples of 128);
            # one fused K=(I_pad+H_pad) MXU matmul covers i2h + h2h + bias
            # (bias lives in the "ones lane" row of w).
            xh = jnp.concatenate([x_t, h], axis=-1)
            h_new = jnp.tanh(
                jnp.dot(xh, w, preferred_element_type=jnp.float32))
            if seq_len % t_blk != 0:
                # Freeze the hidden state on padded (past-the-end) steps.
                valid = (chunk * t_blk + step) < seq_len
                h_new = jnp.where(valid, h_new, h)
            h_hist[step] = h_new
            return h_new

        h_last = lax.fori_loop(0, t_blk, body, h_carry[...], unroll=True)
        h_carry[...] = h_last

        # Deferred h2o: ONE well-utilized (T_BLK*B_pad, H_pad) @ (H_pad, O_pad)
        # matmul per chunk, then a single lane-dense output store.
        tb, bp, hp = h_hist.shape
        h_all = h_hist[...].reshape(tb * bp, hp)
        y = jnp.dot(h_all, wo_ref[...],
                    preferred_element_type=jnp.float32) + bo_ref[...]
        out_ref[...] = y.reshape(tb, bp, out_ref.shape[-1]).astype(out_ref.dtype)

        # Final hidden only needs to be materialized on the last chunk
        # (constant block index -> single HBM writeback at the end).
        @pl.when(chunk == pl.num_programs(0) - 1)
        def _():
            h_out_ref[...] = h_last.astype(h_out_ref.dtype)

    return kernel


# -----------------------------------------------------------------------------
# Host-side packing / wrappers
# -----------------------------------------------------------------------------
def _round_up(n, m):
    return ((n + m - 1) // m) * m


def pack_params(params, input_size, hidden_size, output_size):
    """Fuse i2h/h2h (with bias folded in) and pad to (8, 128)-friendly shapes."""
    wi, bi, wh, bh, wo, bo = params
    # Reserve one spare input lane for the folded bias ("ones lane").
    i_pad = _round_up(input_size + 1, 128)
    h_pad = _round_up(hidden_size, 128)
    o_pad = _round_up(output_size, 128)

    w_ih = jnp.zeros((i_pad + h_pad, h_pad), jnp.float32)
    w_ih = w_ih.at[:input_size, :hidden_size].set(wi)
    # Folded bias: input lane `input_size` carries 1.0 in xs_p, so this row
    # contributes exactly bi + bh to the pre-activation.
    w_ih = w_ih.at[input_size, :hidden_size].set((bi + bh).reshape(-1))
    w_ih = w_ih.at[i_pad:i_pad + hidden_size, :hidden_size].set(wh)
    # Padded hidden lanes see zero weights -> tanh(0) = 0, so they stay zero
    # and contribute nothing downstream.

    w_o = jnp.zeros((h_pad, o_pad), jnp.float32)
    w_o = w_o.at[:hidden_size, :output_size].set(wo)
    b_o = jnp.zeros((1, o_pad), jnp.float32).at[:, :output_size].set(bo)
    return w_ih, w_o, b_o, (i_pad, h_pad, o_pad)


def nba_rnn_forward_seq(xs, hidden0, params, t_blk=16):
    """Run the RNN over a whole sequence in ONE time-chunked Pallas kernel.

    xs:      (T, B, input_size)
    hidden0: (B, hidden_size)
    Returns (outputs (T, B, output_size), final_hidden (B, hidden_size)),
    identical to looping nbaRNN.forward over the T steps.
    """
    T, B, input_size = xs.shape
    hidden_size = hidden0.shape[-1]
    output_size = params[4].shape[1]

    t_blk = max(1, min(t_blk, T))
    t_pad = _round_up(T, t_blk)
    n_chunks = t_pad // t_blk
    b_pad = _round_up(max(B, 8), 8)

    w_ih, w_o, b_o, (i_pad, h_pad, o_pad) = pack_params(
        params, input_size, hidden_size, output_size)

    xs_p = jnp.zeros((t_pad, b_pad, i_pad), jnp.float32)
    xs_p = xs_p.at[:T, :B, :input_size].set(xs)
    xs_p = xs_p.at[:, :, input_size].set(1.0)   # ones lane -> folded bias row
    h0_p = jnp.zeros((b_pad, h_pad), jnp.float32)
    h0_p = h0_p.at[:B, :hidden_size].set(hidden0)

    kernel = _make_rnn_chunk_kernel(t_blk, T)

    grid_spec = pltpu.PrefetchScalarGridSpec(
        num_scalar_prefetch=0,
        grid=(n_chunks,),
        in_specs=[
            pl.BlockSpec((t_blk, b_pad, i_pad), lambda c: (c, 0, 0)),  # x chunk
            pl.BlockSpec((b_pad, h_pad), lambda c: (0, 0)),            # h0
            pl.BlockSpec((i_pad + h_pad, h_pad), lambda c: (0, 0)),    # fused W
            pl.BlockSpec((h_pad, o_pad), lambda c: (0, 0)),            # W_o
            pl.BlockSpec((1, o_pad), lambda c: (0, 0)),                # b_o
        ],
        out_specs=(
            pl.BlockSpec((t_blk, b_pad, o_pad), lambda c: (c, 0, 0)),  # y chunk
            pl.BlockSpec((b_pad, h_pad), lambda c: (0, 0)),            # h_final
        ),
        scratch_shapes=[
            pltpu.VMEM((b_pad, h_pad), jnp.float32),          # hidden carry
            pltpu.VMEM((t_blk, b_pad, h_pad), jnp.float32),   # hidden history
        ],
    )

    out_p, h_p = pl.pallas_call(
        kernel,
        out_shape=(
            jax.ShapeDtypeStruct((t_pad, b_pad, o_pad), jnp.float32),
            jax.ShapeDtypeStruct((b_pad, h_pad), jnp.float32),
        ),
        grid_spec=grid_spec,
        compiler_params=pltpu.CompilerParams(
            dimension_semantics=("arbitrary",),   # sequential recurrence over chunks
            vmem_limit_bytes=32 * 1024 * 1024,    # explicit budget (safe on v7x too)
        ),
    )(xs_p, h0_p, w_ih, w_o, b_o)

    return out_p[:T, :B, :output_size], h_p[:B, :hidden_size]


def nba_rnn_forward(x, hidden, params):
    """One RNN step (matches nbaRNN.forward). Returns (output, new_hidden)."""
    out_seq, h_new = nba_rnn_forward_seq(x[None], hidden, params)
    return out_seq[0], h_new


# -----------------------------------------------------------------------------
# Parameter init + pure-JAX reference
# -----------------------------------------------------------------------------
def init_params(key, input_size, hidden_size, output_size):
    """PyTorch-Linear-style uniform init; weights stored as (in, out)."""
    ks = jax.random.split(key, 6)

    def lin(kw, kb, fan_in, fan_out):
        bound = 1.0 / jnp.sqrt(fan_in)
        w = jax.random.uniform(kw, (fan_in, fan_out), jnp.float32, -bound, bound)
        b = jax.random.uniform(kb, (1, fan_out), jnp.float32, -bound, bound)
        return w, b

    wi, bi = lin(ks[0], ks[1], input_size, hidden_size)   # i2h
    wh, bh = lin(ks[2], ks[3], hidden_size, hidden_size)  # h2h
    wo, bo = lin(ks[4], ks[5], hidden_size, output_size)  # h2o
    return (wi, bi, wh, bh, wo, bo)


def reference_step(x, hidden, params):
    """Pure-JAX reference of nbaRNN.forward (one step)."""
    wi, bi, wh, bh, wo, bo = params
    h_new = jnp.tanh(x @ wi + bi + hidden @ wh + bh)
    out = h_new @ wo + bo
    return out, h_new


def reference_seq(xs, hidden0, params):
    h = hidden0
    outs = []
    for t in range(xs.shape[0]):
        o, h = reference_step(xs[t], h, params)
        outs.append(o)
    return jnp.stack(outs, axis=0), h


# -----------------------------------------------------------------------------
# Main
# -----------------------------------------------------------------------------
if __name__ == "__main__":
    input_size, hidden_size, output_size = 16, 32, 8
    batch, seq_len = 2, 8

    key = jax.random.PRNGKey(0)
    k_params, k_x = jax.random.split(key)

    params = init_params(k_params, input_size, hidden_size, output_size)
    xs = jax.random.normal(k_x, (seq_len, batch, input_size), jnp.float32)
    hidden0 = jnp.zeros((batch, hidden_size), jnp.float32)  # init_hidden()

    # Fused, time-chunked sequence kernel (the optimized path).
    out_seq, h_final = nba_rnn_forward_seq(xs, hidden0, params)
    jax.block_until_ready((out_seq, h_final))

    out_seq_ref, h_final_ref = reference_seq(xs, hidden0, params)
    assert jnp.allclose(out_seq, out_seq_ref, atol=1e-5), "sequence output mismatch"
    assert jnp.allclose(h_final, h_final_ref, atol=1e-5), "final hidden mismatch"

    # Single-step API (matches nbaRNN.forward signature exactly).
    out1, h1 = nba_rnn_forward(xs[0], hidden0, params)
    jax.block_until_ready((out1, h1))
    out1_ref, h1_ref = reference_step(xs[0], hidden0, params)
    assert jnp.allclose(out1, out1_ref, atol=1e-5), "single-step output mismatch"
    assert jnp.allclose(h1, h1_ref, atol=1e-5), "single-step hidden mismatch"

    print("KERNEL_OK")
</pallas_src>

<mosaic_0001>
module attributes {stable_mosaic.version = 11 : i64} {
  func.func @kernel(%arg0: i32, %arg1: memref<8x8x128xf32, #tpu.memory_space<vmem>>, %arg2: memref<8x128xf32, #tpu.memory_space<vmem>>, %arg3: memref<256x128xf32, #tpu.memory_space<vmem>>, %arg4: memref<128x128xf32, #tpu.memory_space<vmem>>, %arg5: memref<1x128xf32, #tpu.memory_space<vmem>>, %arg6: memref<8x8x128xf32, #tpu.memory_space<vmem>>, %arg7: memref<8x128xf32, #tpu.memory_space<vmem>>, %arg8: memref<8x128xf32, #tpu.memory_space<vmem>>, %arg9: memref<8x8x128xf32, #tpu.memory_space<vmem>>) attributes {dimension_semantics = [#tpu.dimension_semantics<arbitrary>], iteration_bounds = array<i64: 1>, scalar_prefetch = 0 : i64, scratch_operands = 2 : i64, tpu.core_type = #tpu.core_type<tc>, window_params = [{transform_indices = @transform_0, window_bounds = array<i64: 8, 8, 128>}, {pipeline_mode = #tpu.pipeline_mode<synchronous>, transform_indices = @transform_1, window_bounds = array<i64: 8, 128>}, {pipeline_mode = #tpu.pipeline_mode<synchronous>, transform_indices = @transform_2, window_bounds = array<i64: 256, 128>}, {pipeline_mode = #tpu.pipeline_mode<synchronous>, transform_indices = @transform_3, window_bounds = array<i64: 128, 128>}, {pipeline_mode = #tpu.pipeline_mode<synchronous>, transform_indices = @transform_4, window_bounds = array<i64: 1, 128>}, {transform_indices = @transform_5, window_bounds = array<i64: 8, 8, 128>}, {pipeline_mode = #tpu.pipeline_mode<synchronous>, transform_indices = @transform_6, window_bounds = array<i64: 8, 128>}]} {
    %c0_i32 = arith.constant 0 : i32
    %0 = arith.cmpi eq, %arg0, %c0_i32 : i32
    %1 = arith.extui %0 : i1 to i32
    %c0_i32_0 = arith.constant 0 : i32
    %2 = arith.cmpi ne, %1, %c0_i32_0 : i32
    scf.if %2 {
      %c0_59 = arith.constant 0 : index
      %c0_60 = arith.constant 0 : index
      %98 = vector.load %arg2[%c0_59, %c0_60] : memref<8x128xf32, #tpu.memory_space<vmem>>, vector<8x128xf32>
      %c0_61 = arith.constant 0 : index
      %c0_62 = arith.constant 0 : index
      %99 = vector.load %arg8[%c0_61, %c0_62] : memref<8x128xf32, #tpu.memory_space<vmem>>, vector<8x128xf32>
      tpu.vector_store %arg8[%c0_61, %c0_62], %98 {strides = array<i32>} : memref<8x128xf32, #tpu.memory_space<vmem>>, vector<8x128xf32>,
    } else {
    }
    %c0 = arith.constant 0 : index
    %c0_1 = arith.constant 0 : index
    %3 = vector.load %arg3[%c0, %c0_1] : memref<256x128xf32, #tpu.memory_space<vmem>>, vector<256x128xf32>
    %c0_2 = arith.constant 0 : index
    %c0_3 = arith.constant 0 : index
    %4 = vector.load %arg8[%c0_2, %c0_3] : memref<8x128xf32, #tpu.memory_space<vmem>>, vector<8x128xf32>
    %c0_i32_4 = arith.constant 0 : i32
    %5 = arith.index_cast %c0_i32_4 : i32 to index
    %c0_5 = arith.constant 0 : index
    %c0_6 = arith.constant 0 : index
    %6 = vector.load %arg1[%5, %c0_5, %c0_6] : memref<8x8x128xf32, #tpu.memory_space<vmem>>, vector<1x8x128xf32>
    %7 = vector.shape_cast %6 : vector<1x8x128xf32> to vector<8x128xf32>
    %8 = tpu.concatenate %7, %4 in 1 : vector<8x128xf32>, vector<8x128xf32> -> vector<8x256xf32>
    %cst = arith.constant dense<0.000000e+00> : vector<8x128xf32>
    %9 = tpu.matmul %8, %3, %cst {dimension_numbers = #tpu.dot_dimension_numbers<[1], [0], [0], [1], [0, 0, 1, 1], [], []>} : vector<8x256xf32>, vector<256x128xf32>, vector<8x128xf32> -> vector<8x128xf32>
    %10 = math.tanh %9 : vector<8x128xf32>
    %11 = arith.index_cast %c0_i32_4 : i32 to index
    %c0_7 = arith.constant 0 : index
    %c0_8 = arith.constant 0 : index
    %12 = vector.load %arg9[%11, %c0_7, %c0_8] : memref<8x8x128xf32, #tpu.memory_space<vmem>>, vector<1x8x128xf32>
    %13 = vector.shape_cast %12 : vector<1x8x128xf32> to vector<8x128xf32>
    %14 = vector.shape_cast %10 : vector<8x128xf32> to vector<1x8x128xf32>
    tpu.vector_store %arg9[%11, %c0_7, %c0_8], %14 {strides = array<i32>} : memref<8x8x128xf32, #tpu.memory_space<vmem>>, vector<1x8x128xf32>,
    %c1_i32 = arith.constant 1 : i32
    %15 = arith.index_cast %c1_i32 : i32 to index
    %c0_9 = arith.constant 0 : index
    %c0_10 = arith.constant 0 : index
    %16 = vector.load %arg1[%15, %c0_9, %c0_10] : memref<8x8x128xf32, #tpu.memory_space<vmem>>, vector<1x8x128xf32>
    %17 = vector.shape_cast %16 : vector<1x8x128xf32> to vector<8x128xf32>
    %18 = tpu.concatenate %17, %10 in 1 : vector<8x128xf32>, vector<8x128xf32> -> vector<8x256xf32>
    %cst_11 = arith.constant dense<0.000000e+00> : vector<8x128xf32>
    %19 = tpu.matmul %18, %3, %cst_11 {dimension_numbers = #tpu.dot_dimension_numbers<[1], [0], [0], [1], [0, 0, 1, 1], [], []>} : vector<8x256xf32>, vector<256x128xf32>, vector<8x128xf32> -> vector<8x128xf32>
    %20 = math.tanh %19 : vector<8x128xf32>
    %21 = arith.index_cast %c1_i32 : i32 to index
    %c0_12 = arith.constant 0 : index
    %c0_13 = arith.constant 0 : index
    %22 = vector.load %arg9[%21, %c0_12, %c0_13] : memref<8x8x128xf32, #tpu.memory_space<vmem>>, vector<1x8x128xf32>
    %23 = vector.shape_cast %22 : vector<1x8x128xf32> to vector<8x128xf32>
    %24 = vector.shape_cast %20 : vector<8x128xf32> to vector<1x8x128xf32>
    tpu.vector_store %arg9[%21, %c0_12, %c0_13], %24 {strides = array<i32>} : memref<8x8x128xf32, #tpu.memory_space<vmem>>, vector<1x8x128xf32>,
    %c2_i32 = arith.constant 2 : i32
    %25 = arith.index_cast %c2_i32 : i32 to index
    %c0_14 = arith.constant 0 : index
    %c0_15 = arith.constant 0 : index
    %26 = vector.load %arg1[%25, %c0_14, %c0_15] : memref<8x8x128xf32, #tpu.memory_space<vmem>>, vector<1x8x128xf32>
    %27 = vector.shape_cast %26 : vector<1x8x128xf32> to vector<8x128xf32>
    %28 = tpu.concatenate %27, %20 in 1 : vector<8x128xf32>, vector<8x128xf32> -> vector<8x256xf32>
    %cst_16 = arith.constant dense<0.000000e+00> : vector<8x128xf32>
    %29 = tpu.matmul %28, %3, %cst_16 {dimension_numbers = #tpu.dot_dimension_numbers<[1], [0], [0], [1], [0, 0, 1, 1], [], []>} : vector<8x256xf32>, vector<256x128xf32>, vector<8x128xf32> -> vector<8x128xf32>
    %30 = math.tanh %29 : vector<8x128xf32>
    %31 = arith.index_cast %c2_i32 : i32 to index
    %c0_17 = arith.constant 0 : index
    %c0_18 = arith.constant 0 : index
    %32 = vector.load %arg9[%31, %c0_17, %c0_18] : memref<8x8x128xf32, #tpu.memory_space<vmem>>, vector<1x8x128xf32>
    %33 = vector.shape_cast %32 : vector<1x8x128xf32> to vector<8x128xf32>
    %34 = vector.shape_cast %30 : vector<8x128xf32> to vector<1x8x128xf32>
    tpu.vector_store %arg9[%31, %c0_17, %c0_18], %34 {strides = array<i32>} : memref<8x8x128xf32, #tpu.memory_space<vmem>>, vector<1x8x128xf32>,
    %c3_i32 = arith.constant 3 : i32
    %35 = arith.index_cast %c3_i32 : i32 to index
    %c0_19 = arith.constant 0 : index
    %c0_20 = arith.constant 0 : index
    %36 = vector.load %arg1[%35, %c0_19, %c0_20] : memref<8x8x128xf32, #tpu.memory_space<vmem>>, vector<1x8x128xf32>
    %37 = vector.shape_cast %36 : vector<1x8x128xf32> to vector<8x128xf32>
    %38 = tpu.concatenate %37, %30 in 1 : vector<8x128xf32>, vector<8x128xf32> -> vector<8x256xf32>
    %cst_21 = arith.constant dense<0.000000e+00> : vector<8x128xf32>
    %39 = tpu.matmul %38, %3, %cst_21 {dimension_numbers = #tpu.dot_dimension_numbers<[1], [0], [0], [1], [0, 0, 1, 1], [], []>} : vector<8x256xf32>, vector<256x128xf32>, vector<8x128xf32> -> vector<8x128xf32>
    %40 = math.tanh %39 : vector<8x128xf32>
    %41 = arith.index_cast %c3_i32 : i32 to index
    %c0_22 = arith.constant 0 : index
    %c0_23 = arith.constant 0 : index
    %42 = vector.load %arg9[%41, %c0_22, %c0_23] : memref<8x8x128xf32, #tpu.memory_space<vmem>>, vector<1x8x128xf32>
    %43 = vector.shape_cast %42 : vector<1x8x128xf32> to vector<8x128xf32>
    %44 = vector.shape_cast %40 : vector<8x128xf32> to vector<1x8x128xf32>
    tpu.vector_store %arg9[%41, %c0_22, %c0_23], %44 {strides = array<i32>} : memref<8x8x128xf32, #tpu.memory_space<vmem>>, vector<1x8x128xf32>,
    %c4_i32 = arith.constant 4 : i32
    %45 = arith.index_cast %c4_i32 : i32 to index
    %c0_24 = arith.constant 0 : index
    %c0_25 = arith.constant 0 : index
    %46 = vector.load %arg1[%45, %c0_24, %c0_25] : memref<8x8x128xf32, #tpu.memory_space<vmem>>, vector<1x8x128xf32>
    %47 = vector.shape_cast %46 : vector<1x8x128xf32> to vector<8x128xf32>
    %48 = tpu.concatenate %47, %40 in 1 : vector<8x128xf32>, vector<8x128xf32> -> vector<8x256xf32>
    %cst_26 = arith.constant dense<0.000000e+00> : vector<8x128xf32>
    %49 = tpu.matmul %48, %3, %cst_26 {dimension_numbers = #tpu.dot_dimension_numbers<[1], [0], [0], [1], [0, 0, 1, 1], [], []>} : vector<8x256xf32>, vector<256x128xf32>, vector<8x128xf32> -> vector<8x128xf32>
    %50 = math.tanh %49 : vector<8x128xf32>
    %51 = arith.index_cast %c4_i32 : i32 to index
    %c0_27 = arith.constant 0 : index
    %c0_28 = arith.constant 0 : index
    %52 = vector.load %arg9[%51, %c0_27, %c0_28] : memref<8x8x128xf32, #tpu.memory_space<vmem>>, vector<1x8x128xf32>
    %53 = vector.shape_cast %52 : vector<1x8x128xf32> to vector<8x128xf32>
    %54 = vector.shape_cast %50 : vector<8x128xf32> to vector<1x8x128xf32>
    tpu.vector_store %arg9[%51, %c0_27, %c0_28], %54 {strides = array<i32>} : memref<8x8x128xf32, #tpu.memory_space<vmem>>, vector<1x8x128xf32>,
    %c5_i32 = arith.constant 5 : i32
    %55 = arith.index_cast %c5_i32 : i32 to index
    %c0_29 = arith.constant 0 : index
    %c0_30 = arith.constant 0 : index
    %56 = vector.load %arg1[%55, %c0_29, %c0_30] : memref<8x8x128xf32, #tpu.memory_space<vmem>>, vector<1x8x128xf32>
    %57 = vector.shape_cast %56 : vector<1x8x128xf32> to vector<8x128xf32>
    %58 = tpu.concatenate %57, %50 in 1 : vector<8x128xf32>, vector<8x128xf32> -> vector<8x256xf32>
    %cst_31 = arith.constant dense<0.000000e+00> : vector<8x128xf32>
    %59 = tpu.matmul %58, %3, %cst_31 {dimension_numbers = #tpu.dot_dimension_numbers<[1], [0], [0], [1], [0, 0, 1, 1], [], []>} : vector<8x256xf32>, vector<256x128xf32>, vector<8x128xf32> -> vector<8x128xf32>
    %60 = math.tanh %59 : vector<8x128xf32>
    %61 = arith.index_cast %c5_i32 : i32 to index
    %c0_32 = arith.constant 0 : index
    %c0_33 = arith.constant 0 : index
    %62 = vector.load %arg9[%61, %c0_32, %c0_33] : memref<8x8x128xf32, #tpu.memory_space<vmem>>, vector<1x8x128xf32>
    %63 = vector.shape_cast %62 : vector<1x8x128xf32> to vector<8x128xf32>
    %64 = vector.shape_cast %60 : vector<8x128xf32> to vector<1x8x128xf32>
    tpu.vector_store %arg9[%61, %c0_32, %c0_33], %64 {strides = array<i32>} : memref<8x8x128xf32, #tpu.memory_space<vmem>>, vector<1x8x128xf32>,
    %c6_i32 = arith.constant 6 : i32
    %65 = arith.index_cast %c6_i32 : i32 to index
    %c0_34 = arith.constant 0 : index
    %c0_35 = arith.constant 0 : index
    %66 = vector.load %arg1[%65, %c0_34, %c0_35] : memref<8x8x128xf32, #tpu.memory_space<vmem>>, vector<1x8x128xf32>
    %67 = vector.shape_cast %66 : vector<1x8x128xf32> to vector<8x128xf32>
    %68 = tpu.concatenate %67, %60 in 1 : vector<8x128xf32>, vector<8x128xf32> -> vector<8x256xf32>
    %cst_36 = arith.constant dense<0.000000e+00> : vector<8x128xf32>
    %69 = tpu.matmul %68, %3, %cst_36 {dimension_numbers = #tpu.dot_dimension_numbers<[1], [0], [0], [1], [0, 0, 1, 1], [], []>} : vector<8x256xf32>, vector<256x128xf32>, vector<8x128xf32> -> vector<8x128xf32>
    %70 = math.tanh %69 : vector<8x128xf32>
    %71 = arith.index_cast %c6_i32 : i32 to index
    %c0_37 = arith.constant 0 : index
    %c0_38 = arith.constant 0 : index
    %72 = vector.load %arg9[%71, %c0_37, %c0_38] : memref<8x8x128xf32, #tpu.memory_space<vmem>>, vector<1x8x128xf32>
    %73 = vector.shape_cast %72 : vector<1x8x128xf32> to vector<8x128xf32>
    %74 = vector.shape_cast %70 : vector<8x128xf32> to vector<1x8x128xf32>
    tpu.vector_store %arg9[%71, %c0_37, %c0_38], %74 {strides = array<i32>} : memref<8x8x128xf32, #tpu.memory_space<vmem>>, vector<1x8x128xf32>,
    %c7_i32 = arith.constant 7 : i32
    %75 = arith.index_cast %c7_i32 : i32 to index
    %c0_39 = arith.constant 0 : index
    %c0_40 = arith.constant 0 : index
    %76 = vector.load %arg1[%75, %c0_39, %c0_40] : memref<8x8x128xf32, #tpu.memory_space<vmem>>, vector<1x8x128xf32>
    %77 = vector.shape_cast %76 : vector<1x8x128xf32> to vector<8x128xf32>
    %78 = tpu.concatenate %77, %70 in 1 : vector<8x128xf32>, vector<8x128xf32> -> vector<8x256xf32>
    %cst_41 = arith.constant dense<0.000000e+00> : vector<8x128xf32>
    %79 = tpu.matmul %78, %3, %cst_41 {dimension_numbers = #tpu.dot_dimension_numbers<[1], [0], [0], [1], [0, 0, 1, 1], [], []>} : vector<8x256xf32>, vector<256x128xf32>, vector<8x128xf32> -> vector<8x128xf32>
    %80 = math.tanh %79 : vector<8x128xf32>
    %81 = arith.index_cast %c7_i32 : i32 to index
    %c0_42 = arith.constant 0 : index
    %c0_43 = arith.constant 0 : index
    %82 = vector.load %arg9[%81, %c0_42, %c0_43] : memref<8x8x128xf32, #tpu.memory_space<vmem>>, vector<1x8x128xf32>
    %83 = vector.shape_cast %82 : vector<1x8x128xf32> to vector<8x128xf32>
    %84 = vector.shape_cast %80 : vector<8x128xf32> to vector<1x8x128xf32>
    tpu.vector_store %arg9[%81, %c0_42, %c0_43], %84 {strides = array<i32>} : memref<8x8x128xf32, #tpu.memory_space<vmem>>, vector<1x8x128xf32>,
    %c8_i32 = arith.constant 8 : i32
    %c0_44 = arith.constant 0 : index
    %c0_45 = arith.constant 0 : index
    %85 = vector.load %arg8[%c0_44, %c0_45] : memref<8x128xf32, #tpu.memory_space<vmem>>, vector<8x128xf32>
    tpu.vector_store %arg8[%c0_44, %c0_45], %80 {strides = array<i32>} : memref<8x128xf32, #tpu.memory_space<vmem>>, vector<8x128xf32>,
    %c0_46 = arith.constant 0 : index
    %c0_47 = arith.constant 0 : index
    %c0_48 = arith.constant 0 : index
    %86 = vector.load %arg9[%c0_46, %c0_47, %c0_48] : memref<8x8x128xf32, #tpu.memory_space<vmem>>, vector<8x8x128xf32>
    %87 = vector.shape_cast %86 : vector<8x8x128xf32> to vector<64x128xf32>
    %c0_49 = arith.constant 0 : index
    %c0_50 = arith.constant 0 : index
    %88 = vector.load %arg4[%c0_49, %c0_50] : memref<128x128xf32, #tpu.memory_space<vmem>>, vector<128x128xf32>
    %cst_51 = arith.constant dense<0.000000e+00> : vector<64x128xf32>
    %89 = tpu.matmul %87, %88, %cst_51 {dimension_numbers = #tpu.dot_dimension_numbers<[1], [0], [0], [1], [0, 0, 1, 1], [], []>} : vector<64x128xf32>, vector<128x128xf32>, vector<64x128xf32> -> vector<64x128xf32>
    %c0_52 = arith.constant 0 : index
    %c0_53 = arith.constant 0 : index
    %90 = vector.load %arg5[%c0_52, %c0_53] : memref<1x128xf32, #tpu.memory_space<vmem>>, vector<1x128xf32>
    %91 = vector.broadcast %90 : vector<1x128xf32> to vector<64x128xf32>
    %92 = arith.addf %89, %91 : vector<64x128xf32>
    %93 = vector.shape_cast %92 : vector<64x128xf32> to vector<8x8x128xf32>
    %c0_54 = arith.constant 0 : index
    %c0_55 = arith.constant 0 : index
    %c0_56 = arith.constant 0 : index
    %94 = vector.load %arg6[%c0_54, %c0_55, %c0_56] : memref<8x8x128xf32, #tpu.memory_space<vmem>>, vector<8x8x128xf32>
    tpu.vector_store %arg6[%c0_54, %c0_55, %c0_56], %93 {strides = array<i32>} : memref<8x8x128xf32, #tpu.memory_space<vmem>>, vector<8x8x128xf32>,
    %c0_i32_57 = arith.constant 0 : i32
    %95 = arith.cmpi eq, %arg0, %c0_i32_57 : i32
    %96 = arith.extui %95 : i1 to i32
    %c0_i32_58 = arith.constant 0 : i32
    %97 = arith.cmpi ne, %96, %c0_i32_58 : i32
    scf.if %97 {
      %c0_59 = arith.constant 0 : index
      %c0_60 = arith.constant 0 : index
      %98 = vector.load %arg7[%c0_59, %c0_60] : memref<8x128xf32, #tpu.memory_space<vmem>>, vector<8x128xf32>
      tpu.vector_store %arg7[%c0_59, %c0_60], %80 {strides = array<i32>} : memref<8x128xf32, #tpu.memory_space<vmem>>, vector<8x128xf32>,
    } else {
    }
    return
  }
  func.func @transform_0(%arg0: i32) -> (i32, i32, i32) {
    %c0_i32 = arith.constant 0 : i32
    %c0_i32_0 = arith.constant 0 : i32
    %c0_i32_1 = arith.constant 0 : i32
    return %arg0, %c0_i32, %c0_i32_0 : i32, i32, i32
  }
  func.func @transform_1(%arg0: i32) -> (i32, i32) {
    %c0_i32 = arith.constant 0 : i32
    %c0_i32_0 = arith.constant 0 : i32
    %c0_i32_1 = arith.constant 0 : i32
    return %c0_i32, %c0_i32_0 : i32, i32
  }
  func.func @transform_2(%arg0: i32) -> (i32, i32) {
    %c0_i32 = arith.constant 0 : i32
    %c0_i32_0 = arith.constant 0 : i32
    %c0_i32_1 = arith.constant 0 : i32
    return %c0_i32, %c0_i32_0 : i32, i32
  }
  func.func @transform_3(%arg0: i32) -> (i32, i32) {
    %c0_i32 = arith.constant 0 : i32
    %c0_i32_0 = arith.constant 0 : i32
    %c0_i32_1 = arith.constant 0 : i32
    return %c0_i32, %c0_i32_0 : i32, i32
  }
  func.func @transform_4(%arg0: i32) -> (i32, i32) {
    %c0_i32 = arith.constant 0 : i32
    %c0_i32_0 = arith.constant 0 : i32
    %c0_i32_1 = arith.constant 0 : i32
    return %c0_i32, %c0_i32_0 : i32, i32
  }
  func.func @transform_5(%arg0: i32) -> (i32, i32, i32) {
    %c0_i32 = arith.constant 0 : i32
    %c0_i32_0 = arith.constant 0 : i32
    %c0_i32_1 = arith.constant 0 : i32
    return %arg0, %c0_i32, %c0_i32_0 : i32, i32, i32
  }
  func.func @transform_6(%arg0: i32) -> (i32, i32) {
    %c0_i32 = arith.constant 0 : i32
    %c0_i32_0 = arith.constant 0 : i32
    %c0_i32_1 = arith.constant 0 : i32
    return %c0_i32, %c0_i32_0 : i32, i32
  }
}

</mosaic_0001>

<llo_original>
// kernel: tpu_custom_call.1
$region0: #{tpu_custom_call.1}
  #allocation0 [shape = 'u32[]', space=smem, size = 0x4, offset = 0x4, fixed_abs, tag = 'smem constant byte address 0x4 - core index']
  #allocation1 [shape = 'u32[144,128]{1,0:T(1,128)}', space=vmem, size = 0x12000, scoped, tag = 'internal scratch']
  #allocation2 [shape = 'f32[8,128]{1,0:T(8,128)}', space=vmem, size = 0x1000, scoped, tag = 'scratch operand']
  #allocation3 [shape = 'f32[8,8,128]{2,1,0:T(8,128)}', space=vmem, size = 0x8000, scoped, tag = 'scratch operand']
  %s0 = inlined_call_operand.hbm [shape: f32[8,8,128], index: 0, kind: input, shape index: {}]
  %s1 = inlined_call_operand.hbm [shape: f32[8,128], index: 1, kind: input, shape index: {}]
  %s2 = inlined_call_operand.hbm [shape: f32[256,128], index: 2, kind: input, shape index: {}]
  %s3 = inlined_call_operand.hbm [shape: f32[128,128], index: 3, kind: input, shape index: {}]
  %s4 = inlined_call_operand.vmem [shape: f32[1,128], index: 4, kind: input, shape index: {}]
  %s5 = inlined_call_operand.hbm [shape: f32[8,8,128], index: 5, kind: output, shape index: {0}]
  %s6 = inlined_call_operand.hbm [shape: f32[8,128], index: 6, kind: output, shape index: {1}]
  %7 = xla_tuple %s5, %s6
  %s8 = sld [smem:[#allocation0]]
  $region62: #{tpu_custom_call.1} parent=0
    _
  %s10 = ssub.s32 1, %s8
  %s11 = scalar_select 0, %s10, %s8
  $region1: #{tpu_custom_call.1} parent=0
    #allocation4 [shape = 'u8[32768]{0}', space=vmem, size = 0x8000, scoped, tag = 'input window, operand 0, single buffered']
    #allocation5 [shape = 's32[1]{0}', space=sflag, size = 0x4, scoped, tag = 'scoped memory for tpu_custom_call.1']
    #allocation6 [shape = 's32[1]{0}', space=sflag, size = 0x4, scoped, tag = 'scoped memory for tpu_custom_call.1']
    #allocation7 [shape = 'u8[4096]{0}', space=vmem, size = 0x1000, scoped, tag = 'input window, operand 1, single buffered']
    #allocation8 [shape = 's32[1]{0}', space=sflag, size = 0x4, scoped, tag = 'scoped memory for tpu_custom_call.1']
    #allocation9 [shape = 'u8[131072]{0}', space=vmem, size = 0x20000, scoped, tag = 'input window, operand 2, single buffered']
    #allocation10 [shape = 'u8[65536]{0}', space=vmem, size = 0x10000, scoped, tag = 'input window, operand 3, single buffered']
    #allocation11 [shape = 's32[1]{0}', space=sflag, size = 0x4, scoped, tag = 'scoped memory for tpu_custom_call.1']
    #allocation12 [shape = 'u8[32768]{0}', space=vmem, size = 0x8000, scoped, tag = 'output window, operand 0, single buffered']
    #allocation13 [shape = 'u8[4096]{0}', space=vmem, size = 0x1000, scoped, tag = 'output window, operand 1, single buffered']
    #allocation14 [shape = 's32[1]{0}', space=sflag, size = 0x4, scoped, tag = 'scoped memory for tpu_custom_call.1']
    %12 = vsyncpa [#allocation5], 0
    %13 = vsyncpa [#allocation8], 0
    %14 = vsyncpa [#allocation11], 0
    %15 = vsyncpa [#allocation6], 0
    %16 = vsyncpa [#allocation14], 0
    // Predicated region
    $region2: #{tpu_custom_call.1} parent=1 // pred_check
      _
    $region3: #{tpu_custom_call.1} parent=1 // pred_check_branch
      %18 = sbr.rel (0) target = $region5
    $region4: #{tpu_custom_call.1} parent=1 // pred_region
      %s20 = ssub.s32 1024, 1024
      %21 = vsyncadd [#allocation5], %s20
      %s22 = sshll.u32 [#allocation4], 4
      %s23 = int_to_ptr.vmem [resolvable:$true] %s22
      %28 = dma.hbm_to_vmem [thread:$0]  %s0, 1024, %s23, [#allocation5], 128, 128, 8
    $region5: #{tpu_custom_call.1} parent=1 // pred_fallthru
      _
    // Predicated region
    $region6: #{tpu_custom_call.1} parent=1 // pred_check
      _
    $region7: #{tpu_custom_call.1} parent=1 // pred_check_branch
      %30 = sbr.rel (0) target = $region9
    $region8: #{tpu_custom_call.1} parent=1 // pred_region
      %s32 = ssub.s32 128, 128
      %33 = vsyncadd [#allocation8], %s32
      %s35 = sshll.u32 [#allocation7], 4
      %s36 = int_to_ptr.vmem [resolvable:$true] %s35
      %38 = dma.hbm_to_vmem [thread:$0]  %s1, 128, %s36, [#allocation8]
    $region9: #{tpu_custom_call.1} parent=1 // pred_fallthru
      _
    // Predicated region
    $region10: #{tpu_custom_call.1} parent=1 // pred_check
      _
    $region11: #{tpu_custom_call.1} parent=1 // pred_check_branch
      %40 = sbr.rel (0) target = $region13
    $region12: #{tpu_custom_call.1} parent=1 // pred_region
      %s42 = ssub.s32 4096, 4096
      %43 = vsyncadd [#allocation8], %s42
      %s44 = sshll.u32 [#allocation9], 4
      %s45 = int_to_ptr.vmem [resolvable:$true] %s44
      %50 = dma.hbm_to_vmem [thread:$0]  %s2, 4096, %s45, [#allocation8], 128, 128, 8
    $region13: #{tpu_custom_call.1} parent=1 // pred_fallthru
      _
    // Predicated region
    $region14: #{tpu_custom_call.1} parent=1 // pred_check
      _
    $region15: #{tpu_custom_call.1} parent=1 // pred_check_branch
      %52 = sbr.rel (0) target = $region17
    $region16: #{tpu_custom_call.1} parent=1 // pred_region
      %s54 = ssub.s32 2048, 2048
      %55 = vsyncadd [#allocation11], %s54
      %s56 = sshll.u32 [#allocation10], 4
      %s57 = int_to_ptr.vmem [resolvable:$true] %s56
      %62 = dma.hbm_to_vmem [thread:$0]  %s3, 2048, %s57, [#allocation11], 128, 128, 8
    $region17: #{tpu_custom_call.1} parent=1 // pred_fallthru
      _
    // Predicated region
    $region18: #{tpu_custom_call.1} parent=1 // pred_check
      _
    $region19: #{tpu_custom_call.1} parent=1 // pred_check_branch
      %64 = sbr.rel (0) target = $region21
    $region20: #{tpu_custom_call.1} parent=1 // pred_region
      _
    $region21: #{tpu_custom_call.1} parent=1 // pred_fallthru
      _
    // Predicated region
    $region22: #{tpu_custom_call.1} parent=1 // pred_check
      _
    $region23: #{tpu_custom_call.1} parent=1 // pred_check_branch
      %66 = sbr.rel (0) target = $region25
    $region24: #{tpu_custom_call.1} parent=1 // pred_region
      %67 = dma.done [#allocation5], 1024
    $region25: #{tpu_custom_call.1} parent=1 // pred_fallthru
      _
    // Predicated region
    $region26: #{tpu_custom_call.1} parent=1 // pred_check
      _
    $region27: #{tpu_custom_call.1} parent=1 // pred_check_branch
      %69 = sbr.rel (0) target = $region29
    $region28: #{tpu_custom_call.1} parent=1 // pred_region
      %70 = dma.done [#allocation8], 128
    $region29: #{tpu_custom_call.1} parent=1 // pred_fallthru
      _
    // Predicated region
    $region30: #{tpu_custom_call.1} parent=1 // pred_check
      _
    $region31: #{tpu_custom_call.1} parent=1 // pred_check_branch
      %72 = sbr.rel (0) target = $region33
    $region32: #{tpu_custom_call.1} parent=1 // pred_region
      %73 = dma.done [#allocation8], 4096
    $region33: #{tpu_custom_call.1} parent=1 // pred_fallthru
      _
    // Predicated region
    $region34: #{tpu_custom_call.1} parent=1 // pred_check
      _
    $region35: #{tpu_custom_call.1} parent=1 // pred_check_branch
      %75 = sbr.rel (0) target = $region37
    $region36: #{tpu_custom_call.1} parent=1 // pred_region
      %76 = dma.done [#allocation11], 2048
    $region37: #{tpu_custom_call.1} parent=1 // pred_fallthru
      _
    %p77 = scmp.eq.s32.totalorder 0, 0
    // Predicated region
    $region38: #{tpu_custom_call.1} parent=1 // pred_check
      %p78 = pneg %p77
    $region39: #{tpu_custom_call.1} parent=1 // pred_check_branch
      %80 = sbr.rel (%p78) target = $region41
    $region40: #{tpu_custom_call.1} parent=1 // pred_region
      %v81 = vld [vmem:[#allocation7] sm:$0xff]
      %82 = vst [vmem:[#allocation2] sm:$0xff] %v81
    $region41: #{tpu_custom_call.1} parent=1 // pred_fallthru
      _
    %v83 = vld [vmem:[#allocation9] sm:$0xff]
    %v84 = vld [vmem:[#allocation9 + $0x8] sm:$0xff]
    %v85 = vld [vmem:[#allocation9 + $0x10] sm:$0xff]
    %v86 = vld [vmem:[#allocation9 + $0x18] sm:$0xff]
    %v87 = vld [vmem:[#allocation9 + $0x20] sm:$0xff]
    %v88 = vld [vmem:[#allocation9 + $0x28] sm:$0xff]
    %v89 = vld [vmem:[#allocation9 + $0x30] sm:$0xff]
    %v90 = vld [vmem:[#allocation9 + $0x38] sm:$0xff]
    %v91 = vld [vmem:[#allocation9 + $0x40] sm:$0xff]
    %v92 = vld [vmem:[#allocation9 + $0x48] sm:$0xff]
    %v93 = vld [vmem:[#allocation9 + $0x50] sm:$0xff]
    %v94 = vld [vmem:[#allocation9 + $0x58] sm:$0xff]
    %v95 = vld [vmem:[#allocation9 + $0x60] sm:$0xff]
    %v96 = vld [vmem:[#allocation9 + $0x68] sm:$0xff]
    %v97 = vld [vmem:[#allocation9 + $0x70] sm:$0xff]
    %v98 = vld [vmem:[#allocation9 + $0x78] sm:$0xff]
    %v99 = vld [vmem:[#allocation9 + $0x80] sm:$0xff]
    %v100 = vld [vmem:[#allocation9 + $0x88] sm:$0xff]
    %v101 = vld [vmem:[#allocation9 + $0x90] sm:$0xff]
    %v102 = vld [vmem:[#allocation9 + $0x98] sm:$0xff]
    %v103 = vld [vmem:[#allocation9 + $0xa0] sm:$0xff]
    %v104 = vld [vmem:[#allocation9 + $0xa8] sm:$0xff]
    %v105 = vld [vmem:[#allocation9 + $0xb0] sm:$0xff]
    %v106 = vld [vmem:[#allocation9 + $0xb8] sm:$0xff]
    %v107 = vld [vmem:[#allocation9 + $0xc0] sm:$0xff]
    %v108 = vld [vmem:[#allocation9 + $0xc8] sm:$0xff]
    %v109 = vld [vmem:[#allocation9 + $0xd0] sm:$0xff]
    %v110 = vld [vmem:[#allocation9 + $0xd8] sm:$0xff]
    %v111 = vld [vmem:[#allocation9 + $0xe0] sm:$0xff]
    %v112 = vld [vmem:[#allocation9 + $0xe8] sm:$0xff]
    %v113 = vld [vmem:[#allocation9 + $0xf0] sm:$0xff]
    %v114 = vld [vmem:[#allocation9 + $0xf8] sm:$0xff]
    %v115 = vld [vmem:[#allocation2] sm:$0xff]
    %v116 = vld [vmem:[#allocation4] sm:$0xff]
    %117 = vmatprep.subr.mxu0 0.0
    %118 = vmatpush1.msra.mxu0 %v83
    %119 = vmatprep.subr.mxu0 0.0
    %120 = vmatpush1.msra.mxu0 %v84
    %121 = vmatprep.subr.mxu0 0.0
    %122 = vmatpush1.msra.mxu0 %v85
    %123 = vmatprep.subr.mxu0 0.0
    %124 = vmatpush1.msra.mxu0 %v86
    %125 = vmatprep.subr.mxu0 0.0
    %126 = vmatpush1.msra.mxu0 %v87
    %127 = vmatprep.subr.mxu0 0.0
    %128 = vmatpush1.msra.mxu0 %v88
    %129 = vmatprep.subr.mxu0 0.0
    %130 = vmatpush1.msra.mxu0 %v89
    %131 = vmatprep.subr.mxu0 0.0
    %132 = vmatpush1.msra.mxu0 %v90
    %133 = vmatprep.subr.mxu0 0.0
    %134 = vmatpush1.msra.mxu0 %v91
    %135 = vmatprep.subr.mxu0 0.0
    %136 = vmatpush1.msra.mxu0 %v92
    %137 = vmatprep.subr.mxu0 0.0
    %138 = vmatpush1.msra.mxu0 %v93
    %139 = vmatprep.subr.mxu0 0.0
    %140 = vmatpush1.msra.mxu0 %v94
    %141 = vmatprep.subr.mxu0 0.0
    %142 = vmatpush1.msra.mxu0 %v95
    %143 = vmatprep.subr.mxu0 0.0
    %144 = vmatpush1.msra.mxu0 %v96
    %145 = vmatprep.subr.mxu0 0.0
    %146 = vmatpush1.msra.mxu0 %v97
    %147 = vmatprep.subr.mxu0 0.0
    %148 = vmatpush1.msra.mxu0 %v98
    %149 = vmatprep.subr.mxu0 0.0
    %150 = vmatpush1.msra.mxu0 %v99
    %151 = vmatprep.subr.mxu0 0.0
    %152 = vmatpush1.msra.mxu0 %v100
    %153 = vmatprep.subr.mxu0 0.0
    %154 = vmatpush1.msra.mxu0 %v101
    %155 = vmatprep.subr.mxu0 0.0
    %156 = vmatpush1.msra.mxu0 %v102
    %157 = vmatprep.subr.mxu0 0.0
    %158 = vmatpush1.msra.mxu0 %v103
    %159 = vmatprep.subr.mxu0 0.0
    %160 = vmatpush1.msra.mxu0 %v104
    %161 = vmatprep.subr.mxu0 0.0
    %162 = vmatpush1.msra.mxu0 %v105
    %163 = vmatprep.subr.mxu0 0.0
    %164 = vmatpush1.msra.mxu0 %v106
    %165 = vmatprep.subr.mxu0 0.0
    %166 = vmatpush1.msra.mxu0 %v107
    %167 = vmatprep.subr.mxu0 0.0
    %168 = vmatpush1.msra.mxu0 %v108
    %169 = vmatprep.subr.mxu0 0.0
    %170 = vmatpush1.msra.mxu0 %v109
    %171 = vmatprep.subr.mxu0 0.0
    %172 = vmatpush1.msra.mxu0 %v110
    %173 = vmatprep.subr.mxu0 0.0
    %174 = vmatpush1.msra.mxu0 %v111
    %175 = vmatprep.subr.mxu0 0.0
    %176 = vmatpush1.msra.mxu0 %v112
    %177 = vmatprep.subr.mxu0 0.0
    %178 = vmatpush1.msra.mxu0 %v113
    %179 = vmatprep.subr.mxu0 0.0
    %180 = vmatpush1.msra.mxu0 %v114
    %181 = vmatprep.mubr.f32.mxu0 %v115
    %182 = vmatmul.mubr.f32.gmra.mrb[0].mxu0 %v116
    %v183 = vpop.f32.mrb[0].mxu0
    %v184 = vadd.f32 0.0, %v183
    %v185 = vpop.f32.mrb[0].mxu0
    %186 = vdwg.mxu0
    %v187 = vtanh.pop %v184
    %188 = vst [vmem:[#allocation3] sm:$0xff] %v187
    %s189 = scalar_lea.vmem [#allocation4], 8
    %v190 = vld [vmem:[%s189] sm:$0xff]
    %191 = vmatprep.subr.mxu0 0.0
    %192 = vmatpush1.msra.mxu0 %v83
    %193 = vmatprep.subr.mxu0 0.0
    %194 = vmatpush1.msra.mxu0 %v84
    %195 = vmatprep.subr.mxu0 0.0
    %196 = vmatpush1.msra.mxu0 %v85
    %197 = vmatprep.subr.mxu0 0.0
    %198 = vmatpush1.msra.mxu0 %v86
    %199 = vmatprep.subr.mxu0 0.0
    %200 = vmatpush1.msra.mxu0 %v87
    %201 = vmatprep.subr.mxu0 0.0
    %202 = vmatpush1.msra.mxu0 %v88
    %203 = vmatprep.subr.mxu0 0.0
    %204 = vmatpush1.msra.mxu0 %v89
    %205 = vmatprep.subr.mxu0 0.0
    %206 = vmatpush1.msra.mxu0 %v90
    %207 = vmatprep.subr.mxu0 0.0
    %208 = vmatpush1.msra.mxu0 %v91
    %209 = vmatprep.subr.mxu0 0.0
    %210 = vmatpush1.msra.mxu0 %v92
    %211 = vmatprep.subr.mxu0 0.0
    %212 = vmatpush1.msra.mxu0 %v93
    %213 = vmatprep.subr.mxu0 0.0
    %214 = vmatpush1.msra.mxu0 %v94
    %215 = vmatprep.subr.mxu0 0.0
    %216 = vmatpush1.msra.mxu0 %v95
    %217 = vmatprep.subr.mxu0 0.0
    %218 = vmatpush1.msra.mxu0 %v96
    %219 = vmatprep.subr.mxu0 0.0
    %220 = vmatpush1.msra.mxu0 %v97
    %221 = vmatprep.subr.mxu0 0.0
    %222 = vmatpush1.msra.mxu0 %v98
    %223 = vmatprep.subr.mxu0 0.0
    %224 = vmatpush1.msra.mxu0 %v99
    %225 = vmatprep.subr.mxu0 0.0
    %226 = vmatpush1.msra.mxu0 %v100
    %227 = vmatprep.subr.mxu0 0.0
    %228 = vmatpush1.msra.mxu0 %v101
    %229 = vmatprep.subr.mxu0 0.0
    %230 = vmatpush1.msra.mxu0 %v102
    %231 = vmatprep.subr.mxu0 0.0
    %232 = vmatpush1.msra.mxu0 %v103
    %233 = vmatprep.subr.mxu0 0.0
    %234 = vmatpush1.msra.mxu0 %v104
    %235 = vmatprep.subr.mxu0 0.0
    %236 = vmatpush1.msra.mxu0 %v105
    %237 = vmatprep.subr.mxu0 0.0
    %238 = vmatpush1.msra.mxu0 %v106
    %239 = vmatprep.subr.mxu0 0.0
    %240 = vmatpush1.msra.mxu0 %v107
    %241 = vmatprep.subr.mxu0 0.0
    %242 = vmatpush1.msra.mxu0 %v108
    %243 = vmatprep.subr.mxu0 0.0
    %244 = vmatpush1.msra.mxu0 %v109
    %245 = vmatprep.subr.mxu0 0.0
    %246 = vmatpush1.msra.mxu0 %v110
    %247 = vmatprep.subr.mxu0 0.0
    %248 = vmatpush1.msra.mxu0 %v111
    %249 = vmatprep.subr.mxu0 0.0
    %250 = vmatpush1.msra.mxu0 %v112
    %251 = vmatprep.subr.mxu0 0.0
    %252 = vmatpush1.msra.mxu0 %v113
    %253 = vmatprep.subr.mxu0 0.0
    %254 = vmatpush1.msra.mxu0 %v114
    %255 = vmatprep.mubr.f32.mxu0 %v187
    %256 = vmatmul.mubr.f32.gmra.mrb[0].mxu0 %v190
    %v257 = vpop.f32.mrb[0].mxu0
    %v258 = vadd.f32 0.0, %v257
    %v259 = vpop.f32.mrb[0].mxu0
    %260 = vdwg.mxu0
    %v261 = vtanh.pop %v258
    %s262 = scalar_lea.vmem [#allocation3], 8
    %263 = vst [vmem:[%s262] sm:$0xff] %v261
    %s264 = scalar_lea.vmem [#allocation4], 16
    %v265 = vld [vmem:[%s264] sm:$0xff]
    %266 = vmatprep.subr.mxu0 0.0
    %267 = vmatpush1.msra.mxu0 %v83
    %268 = vmatprep.subr.mxu0 0.0
    %269 = vmatpush1.msra.mxu0 %v84
    %270 = vmatprep.subr.mxu0 0.0
    %271 = vmatpush1.msra.mxu0 %v85
    %272 = vmatprep.subr.mxu0 0.0
    %273 = vmatpush1.msra.mxu0 %v86
    %274 = vmatprep.subr.mxu0 0.0
    %275 = vmatpush1.msra.mxu0 %v87
    %276 = vmatprep.subr.mxu0 0.0
    %277 = vmatpush1.msra.mxu0 %v88
    %278 = vmatprep.subr.mxu0 0.0
    %279 = vmatpush1.msra.mxu0 %v89
    %280 = vmatprep.subr.mxu0 0.0
    %281 = vmatpush1.msra.mxu0 %v90
    %282 = vmatprep.subr.mxu0 0.0
    %283 = vmatpush1.msra.mxu0 %v91
    %284 = vmatprep.subr.mxu0 0.0
    %285 = vmatpush1.msra.mxu0 %v92
    %286 = vmatprep.subr.mxu0 0.0
    %287 = vmatpush1.msra.mxu0 %v93
    %288 = vmatprep.subr.mxu0 0.0
    %289 = vmatpush1.msra.mxu0 %v94
    %290 = vmatprep.subr.mxu0 0.0
    %291 = vmatpush1.msra.mxu0 %v95
    %292 = vmatprep.subr.mxu0 0.0
    %293 = vmatpush1.msra.mxu0 %v96
    %294 = vmatprep.subr.mxu0 0.0
    %295 = vmatpush1.msra.mxu0 %v97
    %296 = vmatprep.subr.mxu0 0.0
    %297 = vmatpush1.msra.mxu0 %v98
    %298 = vmatprep.subr.mxu0 0.0
    %299 = vmatpush1.msra.mxu0 %v99
    %300 = vmatprep.subr.mxu0 0.0
    %301 = vmatpush1.msra.mxu0 %v100
    %302 = vmatprep.subr.mxu0 0.0
    %303 = vmatpush1.msra.mxu0 %v101
    %304 = vmatprep.subr.mxu0 0.0
    %305 = vmatpush1.msra.mxu0 %v102
    %306 = vmatprep.subr.mxu0 0.0
    %307 = vmatpush1.msra.mxu0 %v103
    %308 = vmatprep.subr.mxu0 0.0
    %309 = vmatpush1.msra.mxu0 %v104
    %310 = vmatprep.subr.mxu0 0.0
    %311 = vmatpush1.msra.mxu0 %v105
    %312 = vmatprep.subr.mxu0 0.0
    %313 = vmatpush1.msra.mxu0 %v106
    %314 = vmatprep.subr.mxu0 0.0
    %315 = vmatpush1.msra.mxu0 %v107
    %316 = vmatprep.subr.mxu0 0.0
    %317 = vmatpush1.msra.mxu0 %v108
    %318 = vmatprep.subr.mxu0 0.0
    %319 = vmatpush1.msra.mxu0 %v109
    %320 = vmatprep.subr.mxu0 0.0
    %321 = vmatpush1.msra.mxu0 %v110
    %322 = vmatprep.subr.mxu0 0.0
    %323 = vmatpush1.msra.mxu0 %v111
    %324 = vmatprep.subr.mxu0 0.0
    %325 = vmatpush1.msra.mxu0 %v112
    %326 = vmatprep.subr.mxu0 0.0
    %327 = vmatpush1.msra.mxu0 %v113
    %328 = vmatprep.subr.mxu0 0.0
    %329 = vmatpush1.msra.mxu0 %v114
    %330 = vmatprep.mubr.f32.mxu0 %v261
    %331 = vmatmul.mubr.f32.gmra.mrb[0].mxu0 %v265
    %v332 = vpop.f32.mrb[0].mxu0
    %v333 = vadd.f32 0.0, %v332
    %v334 = vpop.f32.mrb[0].mxu0
    %335 = vdwg.mxu0
    %v336 = vtanh.pop %v333
    %s337 = scalar_lea.vmem [#allocation3], 16
    %338 = vst [vmem:[%s337] sm:$0xff] %v336
    %s339 = scalar_lea.vmem [#allocation4], 24
    %v340 = vld [vmem:[%s339] sm:$0xff]
    %341 = vmatprep.subr.mxu0 0.0
    %342 = vmatpush1.msra.mxu0 %v83
    %343 = vmatprep.subr.mxu0 0.0
    %344 = vmatpush1.msra.mxu0 %v84
    %345 = vmatprep.subr.mxu0 0.0
    %346 = vmatpush1.msra.mxu0 %v85
    %347 = vmatprep.subr.mxu0 0.0
    %348 = vmatpush1.msra.mxu0 %v86
    %349 = vmatprep.subr.mxu0 0.0
    %350 = vmatpush1.msra.mxu0 %v87
    %351 = vmatprep.subr.mxu0 0.0
    %352 = vmatpush1.msra.mxu0 %v88
    %353 = vmatprep.subr.mxu0 0.0
    %354 = vmatpush1.msra.mxu0 %v89
    %355 = vmatprep.subr.mxu0 0.0
    %356 = vmatpush1.msra.mxu0 %v90
    %357 = vmatprep.subr.mxu0 0.0
    %358 = vmatpush1.msra.mxu0 %v91
    %359 = vmatprep.subr.mxu0 0.0
    %360 = vmatpush1.msra.mxu0 %v92
    %361 = vmatprep.subr.mxu0 0.0
    %362 = vmatpush1.msra.mxu0 %v93
    %363 = vmatprep.subr.mxu0 0.0
    %364 = vmatpush1.msra.mxu0 %v94
    %365 = vmatprep.subr.mxu0 0.0
    %366 = vmatpush1.msra.mxu0 %v95
    %367 = vmatprep.subr.mxu0 0.0
    %368 = vmatpush1.msra.mxu0 %v96
    %369 = vmatprep.subr.mxu0 0.0
    %370 = vmatpush1.msra.mxu0 %v97
    %371 = vmatprep.subr.mxu0 0.0
    %372 = vmatpush1.msra.mxu0 %v98
    %373 = vmatprep.subr.mxu0 0.0
    %374 = vmatpush1.msra.mxu0 %v99
    %375 = vmatprep.subr.mxu0 0.0
    %376 = vmatpush1.msra.mxu0 %v100
    %377 = vmatprep.subr.mxu0 0.0
    %378 = vmatpush1.msra.mxu0 %v101
    %379 = vmatprep.subr.mxu0 0.0
    %380 = vmatpush1.msra.mxu0 %v102
    %381 = vmatprep.subr.mxu0 0.0
    %382 = vmatpush1.msra.mxu0 %v103
    %383 = vmatprep.subr.mxu0 0.0
    %384 = vmatpush1.msra.mxu0 %v104
    %385 = vmatprep.subr.mxu0 0.0
    %386 = vmatpush1.msra.mxu0 %v105
    %387 = vmatprep.subr.mxu0 0.0
    %388 = vmatpush1.msra.mxu0 %v106
    %389 = vmatprep.subr.mxu0 0.0
    %390 = vmatpush1.msra.mxu0 %v107
    %391 = vmatprep.subr.mxu0 0.0
    %392 = vmatpush1.msra.mxu0 %v108
    %393 = vmatprep.subr.mxu0 0.0
    %394 = vmatpush1.msra.mxu0 %v109
    %395 = vmatprep.subr.mxu0 0.0
    %396 = vmatpush1.msra.mxu0 %v110
    %397 = vmatprep.subr.mxu0 0.0
    %398 = vmatpush1.msra.mxu0 %v111
    %399 = vmatprep.subr.mxu0 0.0
    %400 = vmatpush1.msra.mxu0 %v112
    %401 = vmatprep.subr.mxu0 0.0
    %402 = vmatpush1.msra.mxu0 %v113
    %403 = vmatprep.subr.mxu0 0.0
    %404 = vmatpush1.msra.mxu0 %v114
    %405 = vmatprep.mubr.f32.mxu0 %v336
    %406 = vmatmul.mubr.f32.gmra.mrb[0].mxu0 %v340
    %v407 = vpop.f32.mrb[0].mxu0
    %v408 = vadd.f32 0.0, %v407
    %v409 = vpop.f32.mrb[0].mxu0
    %410 = vdwg.mxu0
    %v411 = vtanh.pop %v408
    %s412 = scalar_lea.vmem [#allocation3], 24
    %413 = vst [vmem:[%s412] sm:$0xff] %v411
    %s414 = scalar_lea.vmem [#allocation4], 32
    %v415 = vld [vmem:[%s414] sm:$0xff]
    %416 = vmatprep.subr.mxu0 0.0
    %417 = vmatpush1.msra.mxu0 %v83
    %418 = vmatprep.subr.mxu0 0.0
    %419 = vmatpush1.msra.mxu0 %v84
    %420 = vmatprep.subr.mxu0 0.0
    %421 = vmatpush1.msra.mxu0 %v85
    %422 = vmatprep.subr.mxu0 0.0
    %423 = vmatpush1.msra.mxu0 %v86
    %424 = vmatprep.subr.mxu0 0.0
    %425 = vmatpush1.msra.mxu0 %v87
    %426 = vmatprep.subr.mxu0 0.0
    %427 = vmatpush1.msra.mxu0 %v88
    %428 = vmatprep.subr.mxu0 0.0
    %429 = vmatpush1.msra.mxu0 %v89
    %430 = vmatprep.subr.mxu0 0.0
    %431 = vmatpush1.msra.mxu0 %v90
    %432 = vmatprep.subr.mxu0 0.0
    %433 = vmatpush1.msra.mxu0 %v91
    %434 = vmatprep.subr.mxu0 0.0
    %435 = vmatpush1.msra.mxu0 %v92
    %436 = vmatprep.subr.mxu0 0.0
    %437 = vmatpush1.msra.mxu0 %v93
    %438 = vmatprep.subr.mxu0 0.0
    %439 = vmatpush1.msra.mxu0 %v94
    %440 = vmatprep.subr.mxu0 0.0
    %441 = vmatpush1.msra.mxu0 %v95
    %442 = vmatprep.subr.mxu0 0.0
    %443 = vmatpush1.msra.mxu0 %v96
    %444 = vmatprep.subr.mxu0 0.0
    %445 = vmatpush1.msra.mxu0 %v97
    %446 = vmatprep.subr.mxu0 0.0
    %447 = vmatpush1.msra.mxu0 %v98
    %448 = vmatprep.subr.mxu0 0.0
    %449 = vmatpush1.msra.mxu0 %v99
    %450 = vmatprep.subr.mxu0 0.0
    %451 = vmatpush1.msra.mxu0 %v100
    %452 = vmatprep.subr.mxu0 0.0
    %453 = vmatpush1.msra.mxu0 %v101
    %454 = vmatprep.subr.mxu0 0.0
    %455 = vmatpush1.msra.mxu0 %v102
    %456 = vmatprep.subr.mxu0 0.0
    %457 = vmatpush1.msra.mxu0 %v103
    %458 = vmatprep.subr.mxu0 0.0
    %459 = vmatpush1.msra.mxu0 %v104
    %460 = vmatprep.subr.mxu0 0.0
    %461 = vmatpush1.msra.mxu0 %v105
    %462 = vmatprep.subr.mxu0 0.0
    %463 = vmatpush1.msra.mxu0 %v106
    %464 = vmatprep.subr.mxu0 0.0
    %465 = vmatpush1.msra.mxu0 %v107
    %466 = vmatprep.subr.mxu0 0.0
    %467 = vmatpush1.msra.mxu0 %v108
    %468 = vmatprep.subr.mxu0 0.0
    %469 = vmatpush1.msra.mxu0 %v109
    %470 = vmatprep.subr.mxu0 0.0
    %471 = vmatpush1.msra.mxu0 %v110
    %472 = vmatprep.subr.mxu0 0.0
    %473 = vmatpush1.msra.mxu0 %v111
    %474 = vmatprep.subr.mxu0 0.0
    %475 = vmatpush1.msra.mxu0 %v112
    %476 = vmatprep.subr.mxu0 0.0
    %477 = vmatpush1.msra.mxu0 %v113
    %478 = vmatprep.subr.mxu0 0.0
    %479 = vmatpush1.msra.mxu0 %v114
    %480 = vmatprep.mubr.f32.mxu0 %v411
    %481 = vmatmul.mubr.f32.gmra.mrb[0].mxu0 %v415
    %v482 = vpop.f32.mrb[0].mxu0
    %v483 = vadd.f32 0.0, %v482
    %v484 = vpop.f32.mrb[0].mxu0
    %485 = vdwg.mxu0
    %v486 = vtanh.pop %v483
    %s487 = scalar_lea.vmem [#allocation3], 32
    %488 = vst [vmem:[%s487] sm:$0xff] %v486
    %s489 = scalar_lea.vmem [#allocation4], 40
    %v490 = vld [vmem:[%s489] sm:$0xff]
    %491 = vmatprep.subr.mxu0 0.0
    %492 = vmatpush1.msra.mxu0 %v83
    %493 = vmatprep.subr.mxu0 0.0
    %494 = vmatpush1.msra.mxu0 %v84
    %495 = vmatprep.subr.mxu0 0.0
    %496 = vmatpush1.msra.mxu0 %v85
    %497 = vmatprep.subr.mxu0 0.0
    %498 = vmatpush1.msra.mxu0 %v86
    %499 = vmatprep.subr.mxu0 0.0
    %500 = vmatpush1.msra.mxu0 %v87
    %501 = vmatprep.subr.mxu0 0.0
    %502 = vmatpush1.msra.mxu0 %v88
    %503 = vmatprep.subr.mxu0 0.0
    %504 = vmatpush1.msra.mxu0 %v89
    %505 = vmatprep.subr.mxu0 0.0
    %506 = vmatpush1.msra.mxu0 %v90
    %507 = vmatprep.subr.mxu0 0.0
    %508 = vmatpush1.msra.mxu0 %v91
    %509 = vmatprep.subr.mxu0 0.0
    %510 = vmatpush1.msra.mxu0 %v92
    %511 = vmatprep.subr.mxu0 0.0
    %512 = vmatpush1.msra.mxu0 %v93
    %513 = vmatprep.subr.mxu0 0.0
    %514 = vmatpush1.msra.mxu0 %v94
    %515 = vmatprep.subr.mxu0 0.0
    %516 = vmatpush1.msra.mxu0 %v95
    %517 = vmatprep.subr.mxu0 0.0
    %518 = vmatpush1.msra.mxu0 %v96
    %519 = vmatprep.subr.mxu0 0.0
    %520 = vmatpush1.msra.mxu0 %v97
    %521 = vmatprep.subr.mxu0 0.0
    %522 = vmatpush1.msra.mxu0 %v98
    %523 = vmatprep.subr.mxu0 0.0
    %524 = vmatpush1.msra.mxu0 %v99
    %525 = vmatprep.subr.mxu0 0.0
    %526 = vmatpush1.msra.mxu0 %v100
    %527 = vmatprep.subr.mxu0 0.0
    %528 = vmatpush1.msra.mxu0 %v101
    %529 = vmatprep.subr.mxu0 0.0
    %530 = vmatpush1.msra.mxu0 %v102
    %531 = vmatprep.subr.mxu0 0.0
    %532 = vmatpush1.msra.mxu0 %v103
    %533 = vmatprep.subr.mxu0 0.0
    %534 = vmatpush1.msra.mxu0 %v104
    %535 = vmatprep.subr.mxu0 0.0
    %536 = vmatpush1.msra.mxu0 %v105
    %537 = vmatprep.subr.mxu0 0.0
    %538 = vmatpush1.msra.mxu0 %v106
    %539 = vmatprep.subr.mxu0 0.0
    %540 = vmatpush1.msra.mxu0 %v107
    %541 = vmatprep.subr.mxu0 0.0
    %542 = vmatpush1.msra.mxu0 %v108
    %543 = vmatprep.subr.mxu0 0.0
    %544 = vmatpush1.msra.mxu0 %v109
    %545 = vmatprep.subr.mxu0 0.0
    %546 = vmatpush1.msra.mxu0 %v110
    %547 = vmatprep.subr.mxu0 0.0
    %548 = vmatpush1.msra.mxu0 %v111
    %549 = vmatprep.subr.mxu0 0.0
    %550 = vmatpush1.msra.mxu0 %v112
    %551 = vmatprep.subr.mxu0 0.0
    %552 = vmatpush1.msra.mxu0 %v113
    %553 = vmatprep.subr.mxu0 0.0
    %554 = vmatpush1.msra.mxu0 %v114
    %555 = vmatprep.mubr.f32.mxu0 %v486
    %556 = vmatmul.mubr.f32.gmra.mrb[0].mxu0 %v490
    %v557 = vpop.f32.mrb[0].mxu0
    %v558 = vadd.f32 0.0, %v557
    %v559 = vpop.f32.mrb[0].mxu0
    %560 = vdwg.mxu0
    %v561 = vtanh.pop %v558
    %s562 = scalar_lea.vmem [#allocation3], 40
    %563 = vst [vmem:[%s562] sm:$0xff] %v561
    %s564 = scalar_lea.vmem [#allocation4], 48
    %v565 = vld [vmem:[%s564] sm:$0xff]
    %566 = vmatprep.subr.mxu0 0.0
    %567 = vmatpush1.msra.mxu0 %v83
    %568 = vmatprep.subr.mxu0 0.0
    %569 = vmatpush1.msra.mxu0 %v84
    %570 = vmatprep.subr.mxu0 0.0
    %571 = vmatpush1.msra.mxu0 %v85
    %572 = vmatprep.subr.mxu0 0.0
    %573 = vmatpush1.msra.mxu0 %v86
    %574 = vmatprep.subr.mxu0 0.0
    %575 = vmatpush1.msra.mxu0 %v87
    %576 = vmatprep.subr.mxu0 0.0
    %577 = vmatpush1.msra.mxu0 %v88
    %578 = vmatprep.subr.mxu0 0.0
    %579 = vmatpush1.msra.mxu0 %v89
    %580 = vmatprep.subr.mxu0 0.0
    %581 = vmatpush1.msra.mxu0 %v90
    %582 = vmatprep.subr.mxu0 0.0
    %583 = vmatpush1.msra.mxu0 %v91
    %584 = vmatprep.subr.mxu0 0.0
    %585 = vmatpush1.msra.mxu0 %v92
    %586 = vmatprep.subr.mxu0 0.0
    %587 = vmatpush1.msra.mxu0 %v93
    %588 = vmatprep.subr.mxu0 0.0
    %589 = vmatpush1.msra.mxu0 %v94
    %590 = vmatprep.subr.mxu0 0.0
    %591 = vmatpush1.msra.mxu0 %v95
    %592 = vmatprep.subr.mxu0 0.0
    %593 = vmatpush1.msra.mxu0 %v96
    %594 = vmatprep.subr.mxu0 0.0
    %595 = vmatpush1.msra.mxu0 %v97
    %596 = vmatprep.subr.mxu0 0.0
    %597 = vmatpush1.msra.mxu0 %v98
    %598 = vmatprep.subr.mxu0 0.0
    %599 = vmatpush1.msra.mxu0 %v99
    %600 = vmatprep.subr.mxu0 0.0
    %601 = vmatpush1.msra.mxu0 %v100
    %602 = vmatprep.subr.mxu0 0.0
    %603 = vmatpush1.msra.mxu0 %v101
    %604 = vmatprep.subr.mxu0 0.0
    %605 = vmatpush1.msra.mxu0 %v102
    %606 = vmatprep.subr.mxu0 0.0
    %607 = vmatpush1.msra.mxu0 %v103
    %608 = vmatprep.subr.mxu0 0.0
    %609 = vmatpush1.msra.mxu0 %v104
    %610 = vmatprep.subr.mxu0 0.0
    %611 = vmatpush1.msra.mxu0 %v105
    %612 = vmatprep.subr.mxu0 0.0
    %613 = vmatpush1.msra.mxu0 %v106
    %614 = vmatprep.subr.mxu0 0.0
    %615 = vmatpush1.msra.mxu0 %v107
    %616 = vmatprep.subr.mxu0 0.0
    %617 = vmatpush1.msra.mxu0 %v108
    %618 = vmatprep.subr.mxu0 0.0
    %619 = vmatpush1.msra.mxu0 %v109
    %620 = vmatprep.subr.mxu0 0.0
    %621 = vmatpush1.msra.mxu0 %v110
    %622 = vmatprep.subr.mxu0 0.0
    %623 = vmatpush1.msra.mxu0 %v111
    %624 = vmatprep.subr.mxu0 0.0
    %625 = vmatpush1.msra.mxu0 %v112
    %626 = vmatprep.subr.mxu0 0.0
    %627 = vmatpush1.msra.mxu0 %v113
    %628 = vmatprep.subr.mxu0 0.0
    %629 = vmatpush1.msra.mxu0 %v114
    %630 = vmatprep.mubr.f32.mxu0 %v561
    %631 = vmatmul.mubr.f32.gmra.mrb[0].mxu0 %v565
    %v632 = vpop.f32.mrb[0].mxu0
    %v633 = vadd.f32 0.0, %v632
    %v634 = vpop.f32.mrb[0].mxu0
    %635 = vdwg.mxu0
    %v636 = vtanh.pop %v633
    %s637 = scalar_lea.vmem [#allocation3], 48
    %638 = vst [vmem:[%s637] sm:$0xff] %v636
    %s639 = scalar_lea.vmem [#allocation4], 56
    %v640 = vld [vmem:[%s639] sm:$0xff]
    %641 = vmatprep.subr.mxu0 0.0
    %642 = vmatpush1.msra.mxu0 %v83
    %643 = vmatprep.subr.mxu0 0.0
    %644 = vmatpush1.msra.mxu0 %v84
    %645 = vmatprep.subr.mxu0 0.0
    %646 = vmatpush1.msra.mxu0 %v85
    %647 = vmatprep.subr.mxu0 0.0
    %648 = vmatpush1.msra.mxu0 %v86
    %649 = vmatprep.subr.mxu0 0.0
    %650 = vmatpush1.msra.mxu0 %v87
    %651 = vmatprep.subr.mxu0 0.0
    %652 = vmatpush1.msra.mxu0 %v88
    %653 = vmatprep.subr.mxu0 0.0
    %654 = vmatpush1.msra.mxu0 %v89
    %655 = vmatprep.subr.mxu0 0.0
    %656 = vmatpush1.msra.mxu0 %v90
    %657 = vmatprep.subr.mxu0 0.0
    %658 = vmatpush1.msra.mxu0 %v91
    %659 = vmatprep.subr.mxu0 0.0
    %660 = vmatpush1.msra.mxu0 %v92
    %661 = vmatprep.subr.mxu0 0.0
    %662 = vmatpush1.msra.mxu0 %v93
    %663 = vmatprep.subr.mxu0 0.0
    %664 = vmatpush1.msra.mxu0 %v94
    %665 = vmatprep.subr.mxu0 0.0
    %666 = vmatpush1.msra.mxu0 %v95
    %667 = vmatprep.subr.mxu0 0.0
    %668 = vmatpush1.msra.mxu0 %v96
    %669 = vmatprep.subr.mxu0 0.0
    %670 = vmatpush1.msra.mxu0 %v97
    %671 = vmatprep.subr.mxu0 0.0
    %672 = vmatpush1.msra.mxu0 %v98
    %673 = vmatprep.subr.mxu0 0.0
    %674 = vmatpush1.msra.mxu0 %v99
    %675 = vmatprep.subr.mxu0 0.0
    %676 = vmatpush1.msra.mxu0 %v100
    %677 = vmatprep.subr.mxu0 0.0
    %678 = vmatpush1.msra.mxu0 %v101
    %679 = vmatprep.subr.mxu0 0.0
    %680 = vmatpush1.msra.mxu0 %v102
    %681 = vmatprep.subr.mxu0 0.0
    %682 = vmatpush1.msra.mxu0 %v103
    %683 = vmatprep.subr.mxu0 0.0
    %684 = vmatpush1.msra.mxu0 %v104
    %685 = vmatprep.subr.mxu0 0.0
    %686 = vmatpush1.msra.mxu0 %v105
    %687 = vmatprep.subr.mxu0 0.0
    %688 = vmatpush1.msra.mxu0 %v106
    %689 = vmatprep.subr.mxu0 0.0
    %690 = vmatpush1.msra.mxu0 %v107
    %691 = vmatprep.subr.mxu0 0.0
    %692 = vmatpush1.msra.mxu0 %v108
    %693 = vmatprep.subr.mxu0 0.0
    %694 = vmatpush1.msra.mxu0 %v109
    %695 = vmatprep.subr.mxu0 0.0
    %696 = vmatpush1.msra.mxu0 %v110
    %697 = vmatprep.subr.mxu0 0.0
    %698 = vmatpush1.msra.mxu0 %v111
    %699 = vmatprep.subr.mxu0 0.0
    %700 = vmatpush1.msra.mxu0 %v112
    %701 = vmatprep.subr.mxu0 0.0
    %702 = vmatpush1.msra.mxu0 %v113
    %703 = vmatprep.subr.mxu0 0.0
    %704 = vmatpush1.msra.mxu0 %v114
    %705 = vmatprep.mubr.f32.mxu0 %v636
    %706 = vmatmul.mubr.f32.gmra.mrb[0].mxu0 %v640
    %v707 = vpop.f32.mrb[0].mxu0
    %v708 = vadd.f32 0.0, %v707
    %v709 = vpop.f32.mrb[0].mxu0
    %710 = vdwg.mxu0
    %v711 = vtanh.pop %v708
    %s712 = scalar_lea.vmem [#allocation3], 56
    %713 = vst [vmem:[%s712] sm:$0xff] %v711
    %714 = vst [vmem:[#allocation2] sm:$0xff] %v711
    %v715 = vld [vmem:[#allocation3] sm:$0xff]
    %v716 = vld [vmem:[#allocation3 + $0x8] sm:$0xff]
    %v717 = vld [vmem:[#allocation3 + $0x10] sm:$0xff]
    %v718 = vld [vmem:[#allocation3 + $0x18] sm:$0xff]
    %v719 = vld [vmem:[#allocation3 + $0x20] sm:$0xff]
    %v720 = vld [vmem:[#allocation3 + $0x28] sm:$0xff]
    %v721 = vld [vmem:[#allocation3 + $0x30] sm:$0xff]
    %v722 = vld [vmem:[#allocation3 + $0x38] sm:$0xff]
    %v723 = vld [vmem:[#allocation10] sm:$0xff]
    %v724 = vld [vmem:[#allocation10 + $0x8] sm:$0xff]
    %v725 = vld [vmem:[#allocation10 + $0x10] sm:$0xff]
    %v726 = vld [vmem:[#allocation10 + $0x18] sm:$0xff]
    %v727 = vld [vmem:[#allocation10 + $0x20] sm:$0xff]
    %v728 = vld [vmem:[#allocation10 + $0x28] sm:$0xff]
    %v729 = vld [vmem:[#allocation10 + $0x30] sm:$0xff]
    %v730 = vld [vmem:[#allocation10 + $0x38] sm:$0xff]
    %v731 = vld [vmem:[#allocation10 + $0x40] sm:$0xff]
    %v732 = vld [vmem:[#allocation10 + $0x48] sm:$0xff]
    %v733 = vld [vmem:[#allocation10 + $0x50] sm:$0xff]
    %v734 = vld [vmem:[#allocation10 + $0x58] sm:$0xff]
    %v735 = vld [vmem:[#allocation10 + $0x60] sm:$0xff]
    %v736 = vld [vmem:[#allocation10 + $0x68] sm:$0xff]
    %v737 = vld [vmem:[#allocation10 + $0x70] sm:$0xff]
    %v738 = vld [vmem:[#allocation10 + $0x78] sm:$0xff]
    %v739 = vld [vmem:[%s4] sm:$0x1]
    %v741 = vlaneseq
    %v742 = vshrl.u32 %v741, 7
    %v743 = vsub.s32 0, %v742
    %v744 = vrot.slane %v739, %v743
    %746 = vmatprep.subr.mxu0 0.0
    %747 = vmatpush1.msra.mxu0 %v723
    %748 = vmatprep.subr.mxu0 0.0
    %749 = vmatpush1.msra.mxu0 %v724
    %750 = vmatprep.subr.mxu0 0.0
    %751 = vmatpush1.msra.mxu0 %v725
    %752 = vmatprep.subr.mxu0 0.0
    %753 = vmatpush1.msra.mxu0 %v726
    %754 = vmatprep.subr.mxu0 0.0
    %755 = vmatpush1.msra.mxu0 %v727
    %756 = vmatprep.subr.mxu0 0.0
    %757 = vmatpush1.msra.mxu0 %v728
    %758 = vmatprep.subr.mxu0 0.0
    %759 = vmatpush1.msra.mxu0 %v729
    %760 = vmatprep.subr.mxu0 0.0
    %761 = vmatpush1.msra.mxu0 %v730
    %762 = vmatprep.subr.mxu0 0.0
    %763 = vmatpush1.msra.mxu0 %v731
    %764 = vmatprep.subr.mxu0 0.0
    %765 = vmatpush1.msra.mxu0 %v732
    %766 = vmatprep.subr.mxu0 0.0
    %767 = vmatpush1.msra.mxu0 %v733
    %768 = vmatprep.subr.mxu0 0.0
    %769 = vmatpush1.msra.mxu0 %v734
    %770 = vmatprep.subr.mxu0 0.0
    %771 = vmatpush1.msra.mxu0 %v735
    %772 = vmatprep.subr.mxu0 0.0
    %773 = vmatpush1.msra.mxu0 %v736
    %774 = vmatprep.subr.mxu0 0.0
    %775 = vmatpush1.msra.mxu0 %v737
    %776 = vmatprep.subr.mxu0 0.0
    %777 = vmatpush1.msra.mxu0 %v738
    %778 = vmatprep.subr.mxu0 0.0
    %779 = vmatpush1.msra.mxu0 0.0
    %780 = vmatprep.subr.mxu0 0.0
    %781 = vmatpush1.msra.mxu0 0.0
    %782 = vmatprep.subr.mxu0 0.0
    %783 = vmatpush1.msra.mxu0 0.0
    %784 = vmatprep.subr.mxu0 0.0
    %785 = vmatpush1.msra.mxu0 0.0
    %786 = vmatprep.subr.mxu0 0.0
    %787 = vmatpush1.msra.mxu0 0.0
    %788 = vmatprep.subr.mxu0 0.0
    %789 = vmatpush1.msra.mxu0 0.0
    %790 = vmatprep.subr.mxu0 0.0
    %791 = vmatpush1.msra.mxu0 0.0
    %792 = vmatprep.subr.mxu0 0.0
    %793 = vmatpush1.msra.mxu0 0.0
    %794 = vmatprep.subr.mxu0 0.0
    %795 = vmatpush1.msra.mxu0 0.0
    %796 = vmatprep.subr.mxu0 0.0
    %797 = vmatpush1.msra.mxu0 0.0
    %798 = vmatprep.subr.mxu0 0.0
    %799 = vmatpush1.msra.mxu0 0.0
    %800 = vmatprep.subr.mxu0 0.0
    %801 = vmatpush1.msra.mxu0 0.0
    %802 = vmatprep.subr.mxu0 0.0
    %803 = vmatpush1.msra.mxu0 0.0
    %804 = vmatprep.subr.mxu0 0.0
    %805 = vmatpush1.msra.mxu0 0.0
    %806 = vmatprep.subr.mxu0 0.0
    %807 = vmatpush1.msra.mxu0 0.0
    %808 = vmatprep.subr.mxu0 0.0
    %809 = vmatpush1.msra.mxu0 0.0
    %810 = vmatprep.mubr.f32.mxu0 0.0
    %811 = vmatmul.mubr.f32.gmra.mrb[0].mxu0 %v715
    %v812 = vpop.f32.mrb[0].mxu0
    %v813 = vadd.f32 %v744, %v812
    %v814 = vpop.f32.mrb[0].mxu0
    %815 = vmatprep.mubr.f32.mxu0 0.0
    %816 = vmatmul.mubr.f32.gmra.mrb[0].mxu0 %v716
    %v817 = vpop.f32.mrb[0].mxu0
    %v818 = vadd.f32 %v744, %v817
    %v819 = vpop.f32.mrb[0].mxu0
    %820 = vmatprep.mubr.f32.mxu0 0.0
    %821 = vmatmul.mubr.f32.gmra.mrb[0].mxu0 %v717
    %v822 = vpop.f32.mrb[0].mxu0
    %v823 = vadd.f32 %v744, %v822
    %v824 = vpop.f32.mrb[0].mxu0
    %825 = vmatprep.mubr.f32.mxu0 0.0
    %826 = vmatmul.mubr.f32.gmra.mrb[0].mxu0 %v718
    %v827 = vpop.f32.mrb[0].mxu0
    %v828 = vadd.f32 %v744, %v827
    %v829 = vpop.f32.mrb[0].mxu0
    %830 = vmatprep.mubr.f32.mxu0 0.0
    %831 = vmatmul.mubr.f32.gmra.mrb[0].mxu0 %v719
    %v832 = vpop.f32.mrb[0].mxu0
    %v833 = vadd.f32 %v744, %v832
    %v834 = vpop.f32.mrb[0].mxu0
    %835 = vmatprep.mubr.f32.mxu0 0.0
    %836 = vmatmul.mubr.f32.gmra.mrb[0].mxu0 %v720
    %v837 = vpop.f32.mrb[0].mxu0
    %v838 = vadd.f32 %v744, %v837
    %v839 = vpop.f32.mrb[0].mxu0
    %840 = vmatprep.mubr.f32.mxu0 0.0
    %841 = vmatmul.mubr.f32.gmra.mrb[0].mxu0 %v721
    %v842 = vpop.f32.mrb[0].mxu0
    %v843 = vadd.f32 %v744, %v842
    %v844 = vpop.f32.mrb[0].mxu0
    %845 = vmatprep.mubr.f32.mxu0 0.0
    %846 = vmatmul.mubr.f32.gmra.mrb[0].mxu0 %v722
    %v847 = vpop.f32.mrb[0].mxu0
    %v848 = vadd.f32 %v744, %v847
    %v849 = vpop.f32.mrb[0].mxu0
    %850 = vdwg.mxu0
    %851 = vst [vmem:[#allocation12] sm:$0xff] %v813
    %852 = vst [vmem:[#allocation12 + $0x8] sm:$0xff] %v818
    %853 = vst [vmem:[#allocation12 + $0x10] sm:$0xff] %v823
    %854 = vst [vmem:[#allocation12 + $0x18] sm:$0xff] %v828
    %855 = vst [vmem:[#allocation12 + $0x20] sm:$0xff] %v833
    %856 = vst [vmem:[#allocation12 + $0x28] sm:$0xff] %v838
    %857 = vst [vmem:[#allocation12 + $0x30] sm:$0xff] %v843
    %858 = vst [vmem:[#allocation12 + $0x38] sm:$0xff] %v848
    // Predicated region
    $region42: #{tpu_custom_call.1} parent=1 // pred_check
      %p859 = pneg %p77
    $region43: #{tpu_custom_call.1} parent=1 // pred_check_branch
      %861 = sbr.rel (%p859) target = $region45
    $region44: #{tpu_custom_call.1} parent=1 // pred_region
      %862 = vst [vmem:[#allocation13] sm:$0xff] %v711
    $region45: #{tpu_custom_call.1} parent=1 // pred_fallthru
      _
    // Predicated region
    $region46: #{tpu_custom_call.1} parent=1 // pred_check
      _
    $region47: #{tpu_custom_call.1} parent=1 // pred_check_branch
      %864 = sbr.rel (0) target = $region49
    $region48: #{tpu_custom_call.1} parent=1 // pred_region
      %s866 = ssub.s32 1024, 1024
      %867 = vsyncadd [#allocation6], %s866
      %s868 = sshll.u32 [#allocation12], 4
      %s869 = int_to_ptr.vmem [resolvable:$true] %s868
      %874 = dma.vmem_to_hbm [thread:$0]  %s869, 1024, %s5, [#allocation6], 128, 128, 8
    $region49: #{tpu_custom_call.1} parent=1 // pred_fallthru
      _
    // Predicated region
    $region50: #{tpu_custom_call.1} parent=1 // pred_check
      _
    $region51: #{tpu_custom_call.1} parent=1 // pred_check_branch
      %876 = sbr.rel (0) target = $region53
    $region52: #{tpu_custom_call.1} parent=1 // pred_region
      %s878 = ssub.s32 128, 128
      %879 = vsyncadd [#allocation14], %s878
      %s881 = sshll.u32 [#allocation13], 4
      %s882 = int_to_ptr.vmem [resolvable:$true] %s881
      %884 = dma.vmem_to_hbm [thread:$0]  %s882, 128, %s6, [#allocation14]
    $region53: #{tpu_custom_call.1} parent=1 // pred_fallthru
      _
    // Predicated region
    $region54: #{tpu_custom_call.1} parent=1 // pred_check
      _
    $region55: #{tpu_custom_call.1} parent=1 // pred_check_branch
      %886 = sbr.rel (0) target = $region57
    $region56: #{tpu_custom_call.1} parent=1 // pred_region
      %887 = dma.done [#allocation6], 1024
    $region57: #{tpu_custom_call.1} parent=1 // pred_fallthru
      _
    // Predicated region
    $region58: #{tpu_custom_call.1} parent=1 // pred_check
      _
    $region59: #{tpu_custom_call.1} parent=1 // pred_check_branch
      %889 = sbr.rel (0) target = $region61
    $region60: #{tpu_custom_call.1} parent=1 // pred_region
      %890 = dma.done [#allocation14], 128
    $region61: #{tpu_custom_call.1} parent=1 // pred_fallthru
      _
    %891 = vsyncpa [#allocation5], 1
    %892 = vsyncpa [#allocation8], 1
    %893 = vsyncpa [#allocation11], 1
    %894 = vsyncpa [#allocation6], 1
    %895 = vsyncpa [#allocation14], 1

</llo_original>
